<compile_context>
chip_gen: v7x
topology: tpu7x:2x2x1
jax: 0.10.0
libtpu: 0.0.40
codegen_flags: <defaults>
</compile_context>

<pallas_src>
import functools
import operator

import jax
import jax.numpy as jnp
from jax.experimental import pallas as pl
from jax.experimental.pallas import tpu as pltpu

_BN_EPS = 1e-5
_MAX_TILE_B = 256  # batch-tile rows used when the batch is large & divisible


def _round_up(v, m):
    return ((v + m - 1) // m) * m


def _kaiming_normal(key, fan_in, fan_out):
    # torch.nn.init.kaiming_normal_ default: mode='fan_in', gain=sqrt(2).
    std = (2.0 / fan_in) ** 0.5
    return jax.random.normal(key, (fan_in, fan_out), jnp.float32) * std


# ---------------------------------------------------------------------------
# Fused kernel: input_fc -> residual FC blocks (Linear -> BN(train) -> ReLU)
# -> bottleneck -> concatenated heads, written as one lane-dense slab.
# ---------------------------------------------------------------------------
def _fused_forward_kernel(x_ref, w_in_ref, b_in_ref, w_fc_ref, bn_fc_ref,
                          w_bn_ref, b_bn_ref, w_head_ref, b_head_ref,
                          out_ref, *, num_fc_blocks, num_fcs_per_block):
    n_fc = num_fc_blocks * num_fcs_per_block

    # input_fc (plain linear).
    net = (jnp.dot(x_ref[...], w_in_ref[...],
                   preferred_element_type=jnp.float32) + b_in_ref[...])

    # Residual FC blocks. FC = Linear -> BN(train) -> ReLU (dropout_rate=0).
    layer = 0
    for _ in range(num_fc_blocks):
        residual = net
        for _ in range(num_fcs_per_block):
            y = jnp.dot(net, w_fc_ref[layer],
                        preferred_element_type=jnp.float32)
            # (Linear bias omitted: cancelled exactly by BN mean subtraction.)
            mean = jnp.mean(y, axis=0, keepdims=True)
            var = jnp.mean(jnp.square(y - mean), axis=0, keepdims=True)  # biased
            # Folded BN affine: y*scale + shift.
            scale = bn_fc_ref[layer] * jax.lax.rsqrt(var + _BN_EPS)       # gamma
            shift = bn_fc_ref[n_fc + layer] - mean * scale                # beta
            net = jnp.maximum(y * scale + shift, 0.0)
            layer += 1
        net = net + residual

    # Bottleneck linear.
    bneck = (jnp.dot(net, w_bn_ref[...],
                     preferred_element_type=jnp.float32) + b_bn_ref[...])

    # All heads fused into one MXU matmul (zero-padded so the slab below is a
    # 128-lane multiple).
    heads = (jnp.dot(bneck, w_head_ref[...],
                     preferred_element_type=jnp.float32) + b_head_ref[...])

    # Single lane-dense output slab: [base | bottleneck | heads(+pad)].
    out_ref[...] = jnp.concatenate([net, bneck, heads], axis=-1)


# ---------------------------------------------------------------------------
# Parameter construction (mirrors the PyTorch __init__ defaults).
# ---------------------------------------------------------------------------
def make_simple_model_params(key, feature_dim, hidden, bottleneck_dim,
                             output_sizes, num_fc_blocks=2,
                             num_fcs_per_block=2):
    n_fc = num_fc_blocks * num_fcs_per_block
    keys = iter(jax.random.split(key, n_fc + len(output_sizes) + 2))

    params = {
        "w_in": _kaiming_normal(next(keys), feature_dim, hidden),
        "b_in": jnp.zeros((1, hidden), jnp.float32),
        "w_fc": jnp.stack([_kaiming_normal(next(keys), hidden, hidden)
                           for _ in range(n_fc)]),
        # rows [0:n_fc] = gamma, rows [n_fc:2n_fc] = beta.
        "bn_fc": jnp.concatenate([jnp.ones((n_fc, hidden), jnp.float32),
                                  jnp.zeros((n_fc, hidden), jnp.float32)],
                                 axis=0),
        "w_bn": _kaiming_normal(next(keys), hidden, bottleneck_dim),
        "b_bn": jnp.zeros((1, bottleneck_dim), jnp.float32),
    }

    # Heads: static spec (name, col_start_within_heads, flat_size, trailing_shape).
    head_spec, head_ws, start = [], [], 0
    for name, size in output_sizes.items():
        if isinstance(size, int):
            flat, shape = size, None
        else:
            flat, shape = functools.reduce(operator.mul, size), tuple(size)
        head_ws.append(_kaiming_normal(next(keys), bottleneck_dim, flat))
        head_spec.append((name, start, flat, shape))
        start += flat
    total = start

    # Pad head columns so hidden + bottleneck + head_width is a 128 multiple
    # => the fused output slab is stored lane-dense with a single vst.
    slab = hidden + bottleneck_dim + total
    head_width = _round_up(slab, 128) - hidden - bottleneck_dim
    w_head = jnp.concatenate(head_ws, axis=1)
    params["w_head"] = jnp.pad(w_head, ((0, 0), (0, head_width - total)))
    params["b_head"] = jnp.zeros((1, head_width), jnp.float32)

    return params, tuple(head_spec)


# ---------------------------------------------------------------------------
# Forward wrapper: one pallas_call with a batch grid; weights VMEM-resident.
# ---------------------------------------------------------------------------
def _clip_frobenius(w, max_norm):
    norm = jnp.sqrt(jnp.sum(jnp.square(w)))
    return jnp.where(norm > max_norm, w * (max_norm / norm), w)


def make_forward_fn(head_spec, num_fc_blocks=2, num_fcs_per_block=2,
                    weight_max_norm=0.0):
    kernel = functools.partial(_fused_forward_kernel,
                               num_fc_blocks=num_fc_blocks,
                               num_fcs_per_block=num_fcs_per_block)
    n_fc = num_fc_blocks * num_fcs_per_block

    @jax.jit
    def forward(params, x):
        p = dict(params)
        if weight_max_norm > 0.0:  # LinearWithClipping (inactive by default).
            p["w_in"] = _clip_frobenius(p["w_in"], weight_max_norm)
            p["w_fc"] = jnp.stack([_clip_frobenius(p["w_fc"][i], weight_max_norm)
                                   for i in range(n_fc)])
            p["w_bn"] = _clip_frobenius(p["w_bn"], weight_max_norm)
            cols = [_clip_frobenius(p["w_head"][:, s:s + f], weight_max_norm)
                    for _, s, f, _ in head_spec]
            pad_cols = p["w_head"].shape[1] - sum(f for _, _, f, _ in head_spec)
            if pad_cols > 0:
                cols.append(jnp.zeros((p["w_head"].shape[0], pad_cols),
                                      jnp.float32))
            p["w_head"] = jnp.concatenate(cols, axis=1)

        n, feat = x.shape
        hidden = p["w_in"].shape[1]
        bneck_dim = p["w_bn"].shape[1]
        head_width = p["w_head"].shape[1]
        slab = hidden + bneck_dim + head_width          # 128 multiple

        # Batch tiling: weights stay resident, batch tiles stream. Exact BN
        # (full-batch stats) whenever the grid is (1,), which is the default
        # regime here.
        if n > _MAX_TILE_B and n % _MAX_TILE_B == 0:
            tile_b = _MAX_TILE_B
        else:
            tile_b = n
        grid = (n // tile_b,)

        full = lambda a: pl.BlockSpec(a.shape, lambda i: (0,) * a.ndim)

        cost = pl.CostEstimate(
            flops=2 * n * (feat * hidden + n_fc * hidden * hidden
                           + hidden * bneck_dim + bneck_dim * head_width),
            transcendentals=grid[0] * n_fc * hidden,
            bytes_accessed=4 * (x.size + p["w_in"].size + p["b_in"].size
                                + p["w_fc"].size + p["bn_fc"].size
                                + p["w_bn"].size + p["b_bn"].size
                                + p["w_head"].size + p["b_head"].size
                                + n * slab),
        )

        slab_out = pl.pallas_call(
            kernel,
            out_shape=jax.ShapeDtypeStruct((n, slab), jnp.float32),
            grid=grid,
            in_specs=[
                pl.BlockSpec((tile_b, feat), lambda i: (i, 0)),   # x: batch-tiled
                full(p["w_in"]), full(p["b_in"]),                 # weights resident
                full(p["w_fc"]), full(p["bn_fc"]),
                full(p["w_bn"]), full(p["b_bn"]),
                full(p["w_head"]), full(p["b_head"]),
            ],
            out_specs=pl.BlockSpec((tile_b, slab), lambda i: (i, 0)),
            compiler_params=pltpu.CompilerParams(
                dimension_semantics=("parallel",)),
            cost_estimate=cost,
        )(x, p["w_in"], p["b_in"], p["w_fc"], p["bn_fc"], p["w_bn"],
          p["b_bn"], p["w_head"], p["b_head"])

        # Split the lane-dense slab back into named outputs / activations.
        head_off = hidden + bneck_dim
        outputs = {}
        for name, start, flat, shape in head_spec:
            out = slab_out[:, head_off + start:head_off + start + flat]
            if shape is not None:
                # recursively_expand_dims + reshape_by_last_dims == reshape of
                # the last dim into the target trailing shape.
                out = out.reshape(out.shape[:-1] + shape)
            outputs[name] = out
        activations = {
            "base_activations": slab_out[:, :hidden],
            "bottleneck_activations": slab_out[:, hidden:hidden + bneck_dim],
        }
        return outputs, activations

    return forward


# ---------------------------------------------------------------------------
# Pure-JAX reference (same stacked params) for numerical sanity checking.
# ---------------------------------------------------------------------------
def _ref_forward(params, x, head_spec, num_fc_blocks=2, num_fcs_per_block=2):
    n_fc = num_fc_blocks * num_fcs_per_block
    net = x @ params["w_in"] + params["b_in"]
    layer = 0
    for _ in range(num_fc_blocks):
        residual = net
        for _ in range(num_fcs_per_block):
            y = net @ params["w_fc"][layer]
            mean = jnp.mean(y, axis=0, keepdims=True)
            var = jnp.mean(jnp.square(y - mean), axis=0, keepdims=True)
            y = (y - mean) * jax.lax.rsqrt(var + _BN_EPS)
            y = y * params["bn_fc"][layer] + params["bn_fc"][n_fc + layer]
            net = jnp.maximum(y, 0.0)
            layer += 1
        net = net + residual
    base = net
    bneck = base @ params["w_bn"] + params["b_bn"]
    heads = bneck @ params["w_head"] + params["b_head"]
    outputs = {}
    for name, start, flat, shape in head_spec:
        out = heads[:, start:start + flat]
        if shape is not None:
            out = out.reshape(out.shape[:-1] + shape)
        outputs[name] = out
    return outputs, {"base_activations": base,
                     "bottleneck_activations": bneck}


if __name__ == "__main__":
    # Small shapes consistent with SimpleModel's forward.
    batch = 8
    feature_dim = 32
    hidden = 64            # num_hidden_nodes
    bottleneck_dim = 32    # num_bottleneck_nodes > 0 -> bottleneck path active
    output_sizes = {"logits": 16, "pose": (3, 4)}

    key = jax.random.PRNGKey(0)
    pkey, xkey = jax.random.split(key)
    params, head_spec = make_simple_model_params(
        pkey, feature_dim, hidden, bottleneck_dim, output_sizes)
    x = jax.random.normal(xkey, (batch, feature_dim), jnp.float32)

    forward = make_forward_fn(head_spec)
    outputs, activations = forward(params, x)
    jax.block_until_ready((outputs, activations))

    # Sanity-check against pure-JAX reference.
    ref_outputs, ref_acts = _ref_forward(params, x, head_spec)
    for name in outputs:
        assert outputs[name].shape == ref_outputs[name].shape
        assert jnp.allclose(outputs[name], ref_outputs[name],
                            rtol=1e-4, atol=1e-4), name
    for name in activations:
        assert jnp.allclose(activations[name], ref_acts[name],
                            rtol=1e-4, atol=1e-4), name

    assert outputs["logits"].shape == (batch, 16)
    assert outputs["pose"].shape == (batch, 3, 4)
    assert activations["base_activations"].shape == (batch, hidden)
    assert activations["bottleneck_activations"].shape == (batch, bottleneck_dim)

    print("KERNEL_OK")
</pallas_src>

<mosaic_0001>
module attributes {stable_mosaic.version = 11 : i64} {
  func.func @_fused_forward_kernel(%arg0: i32, %arg1: memref<8x32xf32, #tpu.memory_space<vmem>>, %arg2: memref<32x64xf32, #tpu.memory_space<vmem>>, %arg3: memref<1x64xf32, #tpu.memory_space<vmem>>, %arg4: memref<4x64x64xf32, #tpu.memory_space<vmem>>, %arg5: memref<8x64xf32, #tpu.memory_space<vmem>>, %arg6: memref<64x32xf32, #tpu.memory_space<vmem>>, %arg7: memref<1x32xf32, #tpu.memory_space<vmem>>, %arg8: memref<32x32xf32, #tpu.memory_space<vmem>>, %arg9: memref<1x32xf32, #tpu.memory_space<vmem>>, %arg10: memref<8x128xf32, #tpu.memory_space<vmem>>) attributes {dimension_semantics = [#tpu.dimension_semantics<parallel>], iteration_bounds = array<i64: 1>, scalar_prefetch = 0 : i64, scratch_operands = 0 : i64, tpu.core_type = #tpu.core_type<tc>, window_params = [{transform_indices = @transform_0, window_bounds = array<i64: 8, 32>}, {pipeline_mode = #tpu.pipeline_mode<synchronous>, transform_indices = @transform_1, window_bounds = array<i64: 32, 64>}, {pipeline_mode = #tpu.pipeline_mode<synchronous>, transform_indices = @transform_2, window_bounds = array<i64: 1, 64>}, {pipeline_mode = #tpu.pipeline_mode<synchronous>, transform_indices = @transform_3, window_bounds = array<i64: 4, 64, 64>}, {pipeline_mode = #tpu.pipeline_mode<synchronous>, transform_indices = @transform_4, window_bounds = array<i64: 8, 64>}, {pipeline_mode = #tpu.pipeline_mode<synchronous>, transform_indices = @transform_5, window_bounds = array<i64: 64, 32>}, {pipeline_mode = #tpu.pipeline_mode<synchronous>, transform_indices = @transform_6, window_bounds = array<i64: 1, 32>}, {pipeline_mode = #tpu.pipeline_mode<synchronous>, transform_indices = @transform_7, window_bounds = array<i64: 32, 32>}, {pipeline_mode = #tpu.pipeline_mode<synchronous>, transform_indices = @transform_8, window_bounds = array<i64: 1, 32>}, {transform_indices = @transform_9, window_bounds = array<i64: 8, 128>}]} {
    %c0 = arith.constant 0 : index
    %c0_0 = arith.constant 0 : index
    %0 = vector.load %arg1[%c0, %c0_0] : memref<8x32xf32, #tpu.memory_space<vmem>>, vector<8x32xf32>
    %c0_1 = arith.constant 0 : index
    %c0_2 = arith.constant 0 : index
    %1 = vector.load %arg2[%c0_1, %c0_2] : memref<32x64xf32, #tpu.memory_space<vmem>>, vector<32x64xf32>
    %cst = arith.constant dense<0.000000e+00> : vector<8x64xf32>
    %2 = tpu.matmul %0, %1, %cst {dimension_numbers = #tpu.dot_dimension_numbers<[1], [0], [0], [1], [0, 0, 1, 1], [], []>} : vector<8x32xf32>, vector<32x64xf32>, vector<8x64xf32> -> vector<8x64xf32>
    %c0_3 = arith.constant 0 : index
    %c0_4 = arith.constant 0 : index
    %3 = vector.load %arg3[%c0_3, %c0_4] : memref<1x64xf32, #tpu.memory_space<vmem>>, vector<1x64xf32>
    %4 = vector.broadcast %3 : vector<1x64xf32> to vector<8x64xf32>
    %5 = arith.addf %2, %4 : vector<8x64xf32>
    %c0_5 = arith.constant 0 : index
    %c0_6 = arith.constant 0 : index
    %c0_7 = arith.constant 0 : index
    %6 = vector.load %arg4[%c0_5, %c0_6, %c0_7] : memref<4x64x64xf32, #tpu.memory_space<vmem>>, vector<1x64x64xf32>
    %7 = vector.shape_cast %6 : vector<1x64x64xf32> to vector<64x64xf32>
    %cst_8 = arith.constant dense<0.000000e+00> : vector<8x64xf32>
    %8 = tpu.matmul %5, %7, %cst_8 {dimension_numbers = #tpu.dot_dimension_numbers<[1], [0], [0], [1], [0, 0, 1, 1], [], []>} : vector<8x64xf32>, vector<64x64xf32>, vector<8x64xf32> -> vector<8x64xf32>
    %cst_9 = arith.constant dense<0.000000e+00> : vector<64xf32>
    %9 = vector.multi_reduction <add>, %8, %cst_9 [0] : vector<8x64xf32> to vector<64xf32>
    %10 = vector.shape_cast %9 : vector<64xf32> to vector<1x64xf32>
    %cst_10 = arith.constant 8.000000e+00 : f32
    %11 = vector.broadcast %cst_10 : f32 to vector<1x64xf32>
    %12 = arith.divf %10, %11 : vector<1x64xf32>
    %13 = vector.broadcast %12 : vector<1x64xf32> to vector<8x64xf32>
    %14 = arith.subf %8, %13 : vector<8x64xf32>
    %15 = arith.mulf %14, %14 : vector<8x64xf32>
    %cst_11 = arith.constant dense<0.000000e+00> : vector<64xf32>
    %16 = vector.multi_reduction <add>, %15, %cst_11 [0] : vector<8x64xf32> to vector<64xf32>
    %17 = vector.shape_cast %16 : vector<64xf32> to vector<1x64xf32>
    %cst_12 = arith.constant 8.000000e+00 : f32
    %18 = vector.broadcast %cst_12 : f32 to vector<1x64xf32>
    %19 = arith.divf %17, %18 : vector<1x64xf32>
    %c0_13 = arith.constant 0 : index
    %c0_14 = arith.constant 0 : index
    %20 = vector.load %arg5[%c0_13, %c0_14] : memref<8x64xf32, #tpu.memory_space<vmem>>, vector<1x64xf32>
    %21 = vector.shape_cast %20 : vector<1x64xf32> to vector<64xf32>
    %cst_15 = arith.constant 9.99999974E-6 : f32
    %22 = vector.broadcast %cst_15 : f32 to vector<1x64xf32>
    %23 = arith.addf %19, %22 : vector<1x64xf32>
    %24 = math.rsqrt %23 : vector<1x64xf32>
    %25 = vector.shape_cast %21 : vector<64xf32> to vector<1x64xf32>
    %26 = arith.mulf %25, %24 : vector<1x64xf32>
    %c4 = arith.constant 4 : index
    %c0_16 = arith.constant 0 : index
    %27 = vector.load %arg5[%c4, %c0_16] : memref<8x64xf32, #tpu.memory_space<vmem>>, vector<1x64xf32>
    %28 = vector.shape_cast %27 : vector<1x64xf32> to vector<64xf32>
    %29 = arith.mulf %12, %26 : vector<1x64xf32>
    %30 = vector.shape_cast %28 : vector<64xf32> to vector<1x64xf32>
    %31 = arith.subf %30, %29 : vector<1x64xf32>
    %32 = vector.broadcast %26 : vector<1x64xf32> to vector<8x64xf32>
    %33 = arith.mulf %8, %32 : vector<8x64xf32>
    %34 = vector.broadcast %31 : vector<1x64xf32> to vector<8x64xf32>
    %35 = arith.addf %33, %34 : vector<8x64xf32>
    %cst_17 = arith.constant 0.000000e+00 : f32
    %36 = vector.broadcast %cst_17 : f32 to vector<8x64xf32>
    %37 = arith.maximumf %35, %36 : vector<8x64xf32>
    %c1 = arith.constant 1 : index
    %c0_18 = arith.constant 0 : index
    %c0_19 = arith.constant 0 : index
    %38 = vector.load %arg4[%c1, %c0_18, %c0_19] : memref<4x64x64xf32, #tpu.memory_space<vmem>>, vector<1x64x64xf32>
    %39 = vector.shape_cast %38 : vector<1x64x64xf32> to vector<64x64xf32>
    %cst_20 = arith.constant dense<0.000000e+00> : vector<8x64xf32>
    %40 = tpu.matmul %37, %39, %cst_20 {dimension_numbers = #tpu.dot_dimension_numbers<[1], [0], [0], [1], [0, 0, 1, 1], [], []>} : vector<8x64xf32>, vector<64x64xf32>, vector<8x64xf32> -> vector<8x64xf32>
    %cst_21 = arith.constant dense<0.000000e+00> : vector<64xf32>
    %41 = vector.multi_reduction <add>, %40, %cst_21 [0] : vector<8x64xf32> to vector<64xf32>
    %42 = vector.shape_cast %41 : vector<64xf32> to vector<1x64xf32>
    %cst_22 = arith.constant 8.000000e+00 : f32
    %43 = vector.broadcast %cst_22 : f32 to vector<1x64xf32>
    %44 = arith.divf %42, %43 : vector<1x64xf32>
    %45 = vector.broadcast %44 : vector<1x64xf32> to vector<8x64xf32>
    %46 = arith.subf %40, %45 : vector<8x64xf32>
    %47 = arith.mulf %46, %46 : vector<8x64xf32>
    %cst_23 = arith.constant dense<0.000000e+00> : vector<64xf32>
    %48 = vector.multi_reduction <add>, %47, %cst_23 [0] : vector<8x64xf32> to vector<64xf32>
    %49 = vector.shape_cast %48 : vector<64xf32> to vector<1x64xf32>
    %cst_24 = arith.constant 8.000000e+00 : f32
    %50 = vector.broadcast %cst_24 : f32 to vector<1x64xf32>
    %51 = arith.divf %49, %50 : vector<1x64xf32>
    %c1_25 = arith.constant 1 : index
    %c0_26 = arith.constant 0 : index
    %52 = vector.load %arg5[%c1_25, %c0_26] : memref<8x64xf32, #tpu.memory_space<vmem>>, vector<1x64xf32>
    %53 = vector.shape_cast %52 : vector<1x64xf32> to vector<64xf32>
    %cst_27 = arith.constant 9.99999974E-6 : f32
    %54 = vector.broadcast %cst_27 : f32 to vector<1x64xf32>
    %55 = arith.addf %51, %54 : vector<1x64xf32>
    %56 = math.rsqrt %55 : vector<1x64xf32>
    %57 = vector.shape_cast %53 : vector<64xf32> to vector<1x64xf32>
    %58 = arith.mulf %57, %56 : vector<1x64xf32>
    %c5 = arith.constant 5 : index
    %c0_28 = arith.constant 0 : index
    %59 = vector.load %arg5[%c5, %c0_28] : memref<8x64xf32, #tpu.memory_space<vmem>>, vector<1x64xf32>
    %60 = vector.shape_cast %59 : vector<1x64xf32> to vector<64xf32>
    %61 = arith.mulf %44, %58 : vector<1x64xf32>
    %62 = vector.shape_cast %60 : vector<64xf32> to vector<1x64xf32>
    %63 = arith.subf %62, %61 : vector<1x64xf32>
    %64 = vector.broadcast %58 : vector<1x64xf32> to vector<8x64xf32>
    %65 = arith.mulf %40, %64 : vector<8x64xf32>
    %66 = vector.broadcast %63 : vector<1x64xf32> to vector<8x64xf32>
    %67 = arith.addf %65, %66 : vector<8x64xf32>
    %cst_29 = arith.constant 0.000000e+00 : f32
    %68 = vector.broadcast %cst_29 : f32 to vector<8x64xf32>
    %69 = arith.maximumf %67, %68 : vector<8x64xf32>
    %70 = arith.addf %69, %5 : vector<8x64xf32>
    %c2 = arith.constant 2 : index
    %c0_30 = arith.constant 0 : index
    %c0_31 = arith.constant 0 : index
    %71 = vector.load %arg4[%c2, %c0_30, %c0_31] : memref<4x64x64xf32, #tpu.memory_space<vmem>>, vector<1x64x64xf32>
    %72 = vector.shape_cast %71 : vector<1x64x64xf32> to vector<64x64xf32>
    %cst_32 = arith.constant dense<0.000000e+00> : vector<8x64xf32>
    %73 = tpu.matmul %70, %72, %cst_32 {dimension_numbers = #tpu.dot_dimension_numbers<[1], [0], [0], [1], [0, 0, 1, 1], [], []>} : vector<8x64xf32>, vector<64x64xf32>, vector<8x64xf32> -> vector<8x64xf32>
    %cst_33 = arith.constant dense<0.000000e+00> : vector<64xf32>
    %74 = vector.multi_reduction <add>, %73, %cst_33 [0] : vector<8x64xf32> to vector<64xf32>
    %75 = vector.shape_cast %74 : vector<64xf32> to vector<1x64xf32>
    %cst_34 = arith.constant 8.000000e+00 : f32
    %76 = vector.broadcast %cst_34 : f32 to vector<1x64xf32>
    %77 = arith.divf %75, %76 : vector<1x64xf32>
    %78 = vector.broadcast %77 : vector<1x64xf32> to vector<8x64xf32>
    %79 = arith.subf %73, %78 : vector<8x64xf32>
    %80 = arith.mulf %79, %79 : vector<8x64xf32>
    %cst_35 = arith.constant dense<0.000000e+00> : vector<64xf32>
    %81 = vector.multi_reduction <add>, %80, %cst_35 [0] : vector<8x64xf32> to vector<64xf32>
    %82 = vector.shape_cast %81 : vector<64xf32> to vector<1x64xf32>
    %cst_36 = arith.constant 8.000000e+00 : f32
    %83 = vector.broadcast %cst_36 : f32 to vector<1x64xf32>
    %84 = arith.divf %82, %83 : vector<1x64xf32>
    %c2_37 = arith.constant 2 : index
    %c0_38 = arith.constant 0 : index
    %85 = vector.load %arg5[%c2_37, %c0_38] : memref<8x64xf32, #tpu.memory_space<vmem>>, vector<1x64xf32>
    %86 = vector.shape_cast %85 : vector<1x64xf32> to vector<64xf32>
    %cst_39 = arith.constant 9.99999974E-6 : f32
    %87 = vector.broadcast %cst_39 : f32 to vector<1x64xf32>
    %88 = arith.addf %84, %87 : vector<1x64xf32>
    %89 = math.rsqrt %88 : vector<1x64xf32>
    %90 = vector.shape_cast %86 : vector<64xf32> to vector<1x64xf32>
    %91 = arith.mulf %90, %89 : vector<1x64xf32>
    %c6 = arith.constant 6 : index
    %c0_40 = arith.constant 0 : index
    %92 = vector.load %arg5[%c6, %c0_40] : memref<8x64xf32, #tpu.memory_space<vmem>>, vector<1x64xf32>
    %93 = vector.shape_cast %92 : vector<1x64xf32> to vector<64xf32>
    %94 = arith.mulf %77, %91 : vector<1x64xf32>
    %95 = vector.shape_cast %93 : vector<64xf32> to vector<1x64xf32>
    %96 = arith.subf %95, %94 : vector<1x64xf32>
    %97 = vector.broadcast %91 : vector<1x64xf32> to vector<8x64xf32>
    %98 = arith.mulf %73, %97 : vector<8x64xf32>
    %99 = vector.broadcast %96 : vector<1x64xf32> to vector<8x64xf32>
    %100 = arith.addf %98, %99 : vector<8x64xf32>
    %cst_41 = arith.constant 0.000000e+00 : f32
    %101 = vector.broadcast %cst_41 : f32 to vector<8x64xf32>
    %102 = arith.maximumf %100, %101 : vector<8x64xf32>
    %c3 = arith.constant 3 : index
    %c0_42 = arith.constant 0 : index
    %c0_43 = arith.constant 0 : index
    %103 = vector.load %arg4[%c3, %c0_42, %c0_43] : memref<4x64x64xf32, #tpu.memory_space<vmem>>, vector<1x64x64xf32>
    %104 = vector.shape_cast %103 : vector<1x64x64xf32> to vector<64x64xf32>
    %cst_44 = arith.constant dense<0.000000e+00> : vector<8x64xf32>
    %105 = tpu.matmul %102, %104, %cst_44 {dimension_numbers = #tpu.dot_dimension_numbers<[1], [0], [0], [1], [0, 0, 1, 1], [], []>} : vector<8x64xf32>, vector<64x64xf32>, vector<8x64xf32> -> vector<8x64xf32>
    %cst_45 = arith.constant dense<0.000000e+00> : vector<64xf32>
    %106 = vector.multi_reduction <add>, %105, %cst_45 [0] : vector<8x64xf32> to vector<64xf32>
    %107 = vector.shape_cast %106 : vector<64xf32> to vector<1x64xf32>
    %cst_46 = arith.constant 8.000000e+00 : f32
    %108 = vector.broadcast %cst_46 : f32 to vector<1x64xf32>
    %109 = arith.divf %107, %108 : vector<1x64xf32>
    %110 = vector.broadcast %109 : vector<1x64xf32> to vector<8x64xf32>
    %111 = arith.subf %105, %110 : vector<8x64xf32>
    %112 = arith.mulf %111, %111 : vector<8x64xf32>
    %cst_47 = arith.constant dense<0.000000e+00> : vector<64xf32>
    %113 = vector.multi_reduction <add>, %112, %cst_47 [0] : vector<8x64xf32> to vector<64xf32>
    %114 = vector.shape_cast %113 : vector<64xf32> to vector<1x64xf32>
    %cst_48 = arith.constant 8.000000e+00 : f32
    %115 = vector.broadcast %cst_48 : f32 to vector<1x64xf32>
    %116 = arith.divf %114, %115 : vector<1x64xf32>
    %c3_49 = arith.constant 3 : index
    %c0_50 = arith.constant 0 : index
    %117 = vector.load %arg5[%c3_49, %c0_50] : memref<8x64xf32, #tpu.memory_space<vmem>>, vector<1x64xf32>
    %118 = vector.shape_cast %117 : vector<1x64xf32> to vector<64xf32>
    %cst_51 = arith.constant 9.99999974E-6 : f32
    %119 = vector.broadcast %cst_51 : f32 to vector<1x64xf32>
    %120 = arith.addf %116, %119 : vector<1x64xf32>
    %121 = math.rsqrt %120 : vector<1x64xf32>
    %122 = vector.shape_cast %118 : vector<64xf32> to vector<1x64xf32>
    %123 = arith.mulf %122, %121 : vector<1x64xf32>
    %c7 = arith.constant 7 : index
    %c0_52 = arith.constant 0 : index
    %124 = vector.load %arg5[%c7, %c0_52] : memref<8x64xf32, #tpu.memory_space<vmem>>, vector<1x64xf32>
    %125 = vector.shape_cast %124 : vector<1x64xf32> to vector<64xf32>
    %126 = arith.mulf %109, %123 : vector<1x64xf32>
    %127 = vector.shape_cast %125 : vector<64xf32> to vector<1x64xf32>
    %128 = arith.subf %127, %126 : vector<1x64xf32>
    %129 = vector.broadcast %123 : vector<1x64xf32> to vector<8x64xf32>
    %130 = arith.mulf %105, %129 : vector<8x64xf32>
    %131 = vector.broadcast %128 : vector<1x64xf32> to vector<8x64xf32>
    %132 = arith.addf %130, %131 : vector<8x64xf32>
    %cst_53 = arith.constant 0.000000e+00 : f32
    %133 = vector.broadcast %cst_53 : f32 to vector<8x64xf32>
    %134 = arith.maximumf %132, %133 : vector<8x64xf32>
    %135 = arith.addf %134, %70 : vector<8x64xf32>
    %c0_54 = arith.constant 0 : index
    %c0_55 = arith.constant 0 : index
    %136 = vector.load %arg6[%c0_54, %c0_55] : memref<64x32xf32, #tpu.memory_space<vmem>>, vector<64x32xf32>
    %cst_56 = arith.constant dense<0.000000e+00> : vector<8x32xf32>
    %137 = tpu.matmul %135, %136, %cst_56 {dimension_numbers = #tpu.dot_dimension_numbers<[1], [0], [0], [1], [0, 0, 1, 1], [], []>} : vector<8x64xf32>, vector<64x32xf32>, vector<8x32xf32> -> vector<8x32xf32>
    %c0_57 = arith.constant 0 : index
    %c0_58 = arith.constant 0 : index
    %138 = vector.load %arg7[%c0_57, %c0_58] : memref<1x32xf32, #tpu.memory_space<vmem>>, vector<1x32xf32>
    %139 = vector.broadcast %138 : vector<1x32xf32> to vector<8x32xf32>
    %140 = arith.addf %137, %139 : vector<8x32xf32>
    %c0_59 = arith.constant 0 : index
    %c0_60 = arith.constant 0 : index
    %141 = vector.load %arg8[%c0_59, %c0_60] : memref<32x32xf32, #tpu.memory_space<vmem>>, vector<32x32xf32>
    %cst_61 = arith.constant dense<0.000000e+00> : vector<8x32xf32>
    %142 = tpu.matmul %140, %141, %cst_61 {dimension_numbers = #tpu.dot_dimension_numbers<[1], [0], [0], [1], [0, 0, 1, 1], [], []>} : vector<8x32xf32>, vector<32x32xf32>, vector<8x32xf32> -> vector<8x32xf32>
    %c0_62 = arith.constant 0 : index
    %c0_63 = arith.constant 0 : index
    %143 = vector.load %arg9[%c0_62, %c0_63] : memref<1x32xf32, #tpu.memory_space<vmem>>, vector<1x32xf32>
    %144 = vector.broadcast %143 : vector<1x32xf32> to vector<8x32xf32>
    %145 = arith.addf %142, %144 : vector<8x32xf32>
    %146 = tpu.concatenate %135, %140, %145 in 1 : vector<8x64xf32>, vector<8x32xf32>, vector<8x32xf32> -> vector<8x128xf32>
    %c0_64 = arith.constant 0 : index
    %c0_65 = arith.constant 0 : index
    %147 = vector.load %arg10[%c0_64, %c0_65] : memref<8x128xf32, #tpu.memory_space<vmem>>, vector<8x128xf32>
    tpu.vector_store %arg10[%c0_64, %c0_65], %146 {strides = array<i32>} : memref<8x128xf32, #tpu.memory_space<vmem>>, vector<8x128xf32>,
    return
  }
  func.func @transform_0(%arg0: i32) -> (i32, i32) {
    %c0_i32 = arith.constant 0 : i32
    %c0_i32_0 = arith.constant 0 : i32
    return %arg0, %c0_i32 : i32, i32
  }
  func.func @transform_1(%arg0: i32) -> (i32, i32) {
    %c0_i32 = arith.constant 0 : i32
    %c0_i32_0 = arith.constant 0 : i32
    %c0_i32_1 = arith.constant 0 : i32
    return %c0_i32, %c0_i32_0 : i32, i32
  }
  func.func @transform_2(%arg0: i32) -> (i32, i32) {
    %c0_i32 = arith.constant 0 : i32
    %c0_i32_0 = arith.constant 0 : i32
    %c0_i32_1 = arith.constant 0 : i32
    return %c0_i32, %c0_i32_0 : i32, i32
  }
  func.func @transform_3(%arg0: i32) -> (i32, i32, i32) {
    %c0_i32 = arith.constant 0 : i32
    %c0_i32_0 = arith.constant 0 : i32
    %c0_i32_1 = arith.constant 0 : i32
    %c0_i32_2 = arith.constant 0 : i32
    return %c0_i32, %c0_i32_0, %c0_i32_1 : i32, i32, i32
  }
  func.func @transform_4(%arg0: i32) -> (i32, i32) {
    %c0_i32 = arith.constant 0 : i32
    %c0_i32_0 = arith.constant 0 : i32
    %c0_i32_1 = arith.constant 0 : i32
    return %c0_i32, %c0_i32_0 : i32, i32
  }
  func.func @transform_5(%arg0: i32) -> (i32, i32) {
    %c0_i32 = arith.constant 0 : i32
    %c0_i32_0 = arith.constant 0 : i32
    %c0_i32_1 = arith.constant 0 : i32
    return %c0_i32, %c0_i32_0 : i32, i32
  }
  func.func @transform_6(%arg0: i32) -> (i32, i32) {
    %c0_i32 = arith.constant 0 : i32
    %c0_i32_0 = arith.constant 0 : i32
    %c0_i32_1 = arith.constant 0 : i32
    return %c0_i32, %c0_i32_0 : i32, i32
  }
  func.func @transform_7(%arg0: i32) -> (i32, i32) {
    %c0_i32 = arith.constant 0 : i32
    %c0_i32_0 = arith.constant 0 : i32
    %c0_i32_1 = arith.constant 0 : i32
    return %c0_i32, %c0_i32_0 : i32, i32
  }
  func.func @transform_8(%arg0: i32) -> (i32, i32) {
    %c0_i32 = arith.constant 0 : i32
    %c0_i32_0 = arith.constant 0 : i32
    %c0_i32_1 = arith.constant 0 : i32
    return %c0_i32, %c0_i32_0 : i32, i32
  }
  func.func @transform_9(%arg0: i32) -> (i32, i32) {
    %c0_i32 = arith.constant 0 : i32
    %c0_i32_0 = arith.constant 0 : i32
    return %arg0, %c0_i32 : i32, i32
  }
}

</mosaic_0001>

<llo_original>
// kernel: forward.1
$region0: #{forward.1}
  #allocation0 [shape = 'u32[]', space=smem, size = 0x4, offset = 0x4, fixed_abs, tag = 'smem constant byte address 0x4 - core index']
  #allocation1 [shape = 'u32[144,128]{1,0:T(1,128)}', space=vmem, size = 0x12000, scoped, tag = 'internal scratch']
  %s0 = inlined_call_operand.vmem [shape: f32[8,32], index: 0, kind: input, shape index: {}]
  %s1 = inlined_call_operand.vmem [shape: f32[32,64], index: 1, kind: input, shape index: {}]
  %s2 = inlined_call_operand.vmem [shape: f32[1,64], index: 2, kind: input, shape index: {}]
  %s3 = inlined_call_operand.hbm [shape: f32[4,64,64], index: 3, kind: input, shape index: {}]
  %s4 = inlined_call_operand.vmem [shape: f32[8,64], index: 4, kind: input, shape index: {}]
  %s5 = inlined_call_operand.vmem [shape: f32[64,32], index: 5, kind: input, shape index: {}]
  %s6 = inlined_call_operand.vmem [shape: f32[1,32], index: 6, kind: input, shape index: {}]
  %s7 = inlined_call_operand.vmem [shape: f32[32,32], index: 7, kind: input, shape index: {}]
  %s8 = inlined_call_operand.vmem [shape: f32[1,32], index: 8, kind: input, shape index: {}]
  %s9 = inlined_call_operand.vmem [shape: f32[8,128], index: 9, kind: output, shape index: {}]
  %s10 = sld [smem:[#allocation0]]
  $region50: #{forward.1} parent=0
    _
  %s12 = ssub.s32 1, %s10
  %s13 = scalar_select 0, %s12, %s10
  $region1: #{forward.1} parent=0
    #allocation2 [shape = 'u8[131072]{0}', space=vmem, size = 0x20000, scoped, tag = 'input window, operand 3, single buffered']
    #allocation3 [shape = 's32[1]{0}', space=sflag, size = 0x4, scoped, tag = 'scoped memory for forward.1']
    %14 = vsyncpa [#allocation3], 0
    // Predicated region
    $region2: #{forward.1} parent=1 // pred_check
      _
    $region3: #{forward.1} parent=1 // pred_check_branch
      %16 = sbr.rel (0) target = $region5
    $region4: #{forward.1} parent=1 // pred_region
      _
    $region5: #{forward.1} parent=1 // pred_fallthru
      _
    // Predicated region
    $region6: #{forward.1} parent=1 // pred_check
      _
    $region7: #{forward.1} parent=1 // pred_check_branch
      %18 = sbr.rel (0) target = $region9
    $region8: #{forward.1} parent=1 // pred_region
      _
    $region9: #{forward.1} parent=1 // pred_fallthru
      _
    // Predicated region
    $region10: #{forward.1} parent=1 // pred_check
      _
    $region11: #{forward.1} parent=1 // pred_check_branch
      %20 = sbr.rel (0) target = $region13
    $region12: #{forward.1} parent=1 // pred_region
      _
    $region13: #{forward.1} parent=1 // pred_fallthru
      _
    // Predicated region
    $region14: #{forward.1} parent=1 // pred_check
      _
    $region15: #{forward.1} parent=1 // pred_check_branch
      %22 = sbr.rel (0) target = $region17
    $region16: #{forward.1} parent=1 // pred_region
      %s24 = ssub.s32 4096, 4096
      %25 = vsyncadd [#allocation3], %s24
      %s26 = sshll.u32 [#allocation2], 4
      %s27 = int_to_ptr.vmem [resolvable:$true] %s26
      %32 = dma.hbm_to_vmem [thread:$0]  %s3, 4096, %s27, [#allocation3], 128, 128, 8
    $region17: #{forward.1} parent=1 // pred_fallthru
      _
    // Predicated region
    $region18: #{forward.1} parent=1 // pred_check
      _
    $region19: #{forward.1} parent=1 // pred_check_branch
      %34 = sbr.rel (0) target = $region21
    $region20: #{forward.1} parent=1 // pred_region
      _
    $region21: #{forward.1} parent=1 // pred_fallthru
      _
    // Predicated region
    $region22: #{forward.1} parent=1 // pred_check
      _
    $region23: #{forward.1} parent=1 // pred_check_branch
      %36 = sbr.rel (0) target = $region25
    $region24: #{forward.1} parent=1 // pred_region
      _
    $region25: #{forward.1} parent=1 // pred_fallthru
      _
    // Predicated region
    $region26: #{forward.1} parent=1 // pred_check
      _
    $region27: #{forward.1} parent=1 // pred_check_branch
      %38 = sbr.rel (0) target = $region29
    $region28: #{forward.1} parent=1 // pred_region
      _
    $region29: #{forward.1} parent=1 // pred_fallthru
      _
    // Predicated region
    $region30: #{forward.1} parent=1 // pred_check
      _
    $region31: #{forward.1} parent=1 // pred_check_branch
      %40 = sbr.rel (0) target = $region33
    $region32: #{forward.1} parent=1 // pred_region
      _
    $region33: #{forward.1} parent=1 // pred_fallthru
      _
    // Predicated region
    $region34: #{forward.1} parent=1 // pred_check
      _
    $region35: #{forward.1} parent=1 // pred_check_branch
      %42 = sbr.rel (0) target = $region37
    $region36: #{forward.1} parent=1 // pred_region
      _
    $region37: #{forward.1} parent=1 // pred_fallthru
      _
    // Predicated region
    $region38: #{forward.1} parent=1 // pred_check
      _
    $region39: #{forward.1} parent=1 // pred_check_branch
      %44 = sbr.rel (0) target = $region41
    $region40: #{forward.1} parent=1 // pred_region
      %45 = dma.done [#allocation3], 4096
    $region41: #{forward.1} parent=1 // pred_fallthru
      _
    %v46 = vld [vmem:[%s0] sm:$0xff]
    %v47 = vld [vmem:[%s1] sm:$0xff]
    %v48 = vld [vmem:[%s1 + $0x8] sm:$0xff]
    %v49 = vld [vmem:[%s1 + $0x10] sm:$0xff]
    %v50 = vld [vmem:[%s1 + $0x18] sm:$0xff]
    %v51 = vld [vmem:[%s2] sm:$0x1]
    %v53 = vlaneseq
    %v54 = vshrl.u32 %v53, 7
    %v55 = vsub.s32 0, %v54
    %v56 = vrot.slane %v51, %v55
    %vm58 = vcmask 261120
    %v60 = vsel %vm58, %v46, 0
    %62 = vmatprep.subr.mxu0 0.0
    %63 = vmatpush1.msra.mxu0 %v47
    %64 = vmatprep.subr.mxu0 0.0
    %65 = vmatpush1.msra.mxu0 %v48
    %66 = vmatprep.subr.mxu0 0.0
    %67 = vmatpush1.msra.mxu0 %v49
    %68 = vmatprep.subr.mxu0 0.0
    %69 = vmatpush1.msra.mxu0 %v50
    %70 = vmatprep.subr.mxu0 0.0
    %71 = vmatpush1.msra.mxu0 0.0
    %72 = vmatprep.subr.mxu0 0.0
    %73 = vmatpush1.msra.mxu0 0.0
    %74 = vmatprep.subr.mxu0 0.0
    %75 = vmatpush1.msra.mxu0 0.0
    %76 = vmatprep.subr.mxu0 0.0
    %77 = vmatpush1.msra.mxu0 0.0
    %78 = vmatprep.subr.mxu0 0.0
    %79 = vmatpush1.msra.mxu0 0.0
    %80 = vmatprep.subr.mxu0 0.0
    %81 = vmatpush1.msra.mxu0 0.0
    %82 = vmatprep.subr.mxu0 0.0
    %83 = vmatpush1.msra.mxu0 0.0
    %84 = vmatprep.subr.mxu0 0.0
    %85 = vmatpush1.msra.mxu0 0.0
    %86 = vmatprep.subr.mxu0 0.0
    %87 = vmatpush1.msra.mxu0 0.0
    %88 = vmatprep.subr.mxu0 0.0
    %89 = vmatpush1.msra.mxu0 0.0
    %90 = vmatprep.subr.mxu0 0.0
    %91 = vmatpush1.msra.mxu0 0.0
    %92 = vmatprep.subr.mxu0 0.0
    %93 = vmatpush1.msra.mxu0 0.0
    %94 = vmatprep.subr.mxu0 0.0
    %95 = vmatpush1.msra.mxu0 0.0
    %96 = vmatprep.subr.mxu0 0.0
    %97 = vmatpush1.msra.mxu0 0.0
    %98 = vmatprep.subr.mxu0 0.0
    %99 = vmatpush1.msra.mxu0 0.0
    %100 = vmatprep.subr.mxu0 0.0
    %101 = vmatpush1.msra.mxu0 0.0
    %102 = vmatprep.subr.mxu0 0.0
    %103 = vmatpush1.msra.mxu0 0.0
    %104 = vmatprep.subr.mxu0 0.0
    %105 = vmatpush1.msra.mxu0 0.0
    %106 = vmatprep.subr.mxu0 0.0
    %107 = vmatpush1.msra.mxu0 0.0
    %108 = vmatprep.subr.mxu0 0.0
    %109 = vmatpush1.msra.mxu0 0.0
    %110 = vmatprep.subr.mxu0 0.0
    %111 = vmatpush1.msra.mxu0 0.0
    %112 = vmatprep.subr.mxu0 0.0
    %113 = vmatpush1.msra.mxu0 0.0
    %114 = vmatprep.subr.mxu0 0.0
    %115 = vmatpush1.msra.mxu0 0.0
    %116 = vmatprep.subr.mxu0 0.0
    %117 = vmatpush1.msra.mxu0 0.0
    %118 = vmatprep.subr.mxu0 0.0
    %119 = vmatpush1.msra.mxu0 0.0
    %120 = vmatprep.subr.mxu0 0.0
    %121 = vmatpush1.msra.mxu0 0.0
    %122 = vmatprep.subr.mxu0 0.0
    %123 = vmatpush1.msra.mxu0 0.0
    %124 = vmatprep.subr.mxu0 0.0
    %125 = vmatpush1.msra.mxu0 0.0
    %126 = vmatprep.mubr.f32.mxu0 0.0
    %127 = vmatmul.mubr.f32.gmra.mrb[0].mxu0 %v60
    %v128 = vpop.f32.mrb[0].mxu0
    %v129 = vadd.f32 %v56, %v128
    %v130 = vpop.f32.mrb[0].mxu0
    %131 = vdwg.mxu0
    %v132 = vld [vmem:[#allocation2] sm:$0xff]
    %v133 = vld [vmem:[#allocation2 + $0x8] sm:$0xff]
    %v134 = vld [vmem:[#allocation2 + $0x10] sm:$0xff]
    %v135 = vld [vmem:[#allocation2 + $0x18] sm:$0xff]
    %v136 = vld [vmem:[#allocation2 + $0x20] sm:$0xff]
    %v137 = vld [vmem:[#allocation2 + $0x28] sm:$0xff]
    %v138 = vld [vmem:[#allocation2 + $0x30] sm:$0xff]
    %v139 = vld [vmem:[#allocation2 + $0x38] sm:$0xff]
    %vm140 = vcmask 523264
    %v142 = vsel %vm140, %v129, 0
    %144 = vmatprep.subr.mxu0 0.0
    %145 = vmatpush1.msra.mxu0 %v132
    %146 = vmatprep.subr.mxu0 0.0
    %147 = vmatpush1.msra.mxu0 %v133
    %148 = vmatprep.subr.mxu0 0.0
    %149 = vmatpush1.msra.mxu0 %v134
    %150 = vmatprep.subr.mxu0 0.0
    %151 = vmatpush1.msra.mxu0 %v135
    %152 = vmatprep.subr.mxu0 0.0
    %153 = vmatpush1.msra.mxu0 %v136
    %154 = vmatprep.subr.mxu0 0.0
    %155 = vmatpush1.msra.mxu0 %v137
    %156 = vmatprep.subr.mxu0 0.0
    %157 = vmatpush1.msra.mxu0 %v138
    %158 = vmatprep.subr.mxu0 0.0
    %159 = vmatpush1.msra.mxu0 %v139
    %160 = vmatprep.subr.mxu0 0.0
    %161 = vmatpush1.msra.mxu0 0.0
    %162 = vmatprep.subr.mxu0 0.0
    %163 = vmatpush1.msra.mxu0 0.0
    %164 = vmatprep.subr.mxu0 0.0
    %165 = vmatpush1.msra.mxu0 0.0
    %166 = vmatprep.subr.mxu0 0.0
    %167 = vmatpush1.msra.mxu0 0.0
    %168 = vmatprep.subr.mxu0 0.0
    %169 = vmatpush1.msra.mxu0 0.0
    %170 = vmatprep.subr.mxu0 0.0
    %171 = vmatpush1.msra.mxu0 0.0
    %172 = vmatprep.subr.mxu0 0.0
    %173 = vmatpush1.msra.mxu0 0.0
    %174 = vmatprep.subr.mxu0 0.0
    %175 = vmatpush1.msra.mxu0 0.0
    %176 = vmatprep.subr.mxu0 0.0
    %177 = vmatpush1.msra.mxu0 0.0
    %178 = vmatprep.subr.mxu0 0.0
    %179 = vmatpush1.msra.mxu0 0.0
    %180 = vmatprep.subr.mxu0 0.0
    %181 = vmatpush1.msra.mxu0 0.0
    %182 = vmatprep.subr.mxu0 0.0
    %183 = vmatpush1.msra.mxu0 0.0
    %184 = vmatprep.subr.mxu0 0.0
    %185 = vmatpush1.msra.mxu0 0.0
    %186 = vmatprep.subr.mxu0 0.0
    %187 = vmatpush1.msra.mxu0 0.0
    %188 = vmatprep.subr.mxu0 0.0
    %189 = vmatpush1.msra.mxu0 0.0
    %190 = vmatprep.subr.mxu0 0.0
    %191 = vmatpush1.msra.mxu0 0.0
    %192 = vmatprep.subr.mxu0 0.0
    %193 = vmatpush1.msra.mxu0 0.0
    %194 = vmatprep.subr.mxu0 0.0
    %195 = vmatpush1.msra.mxu0 0.0
    %196 = vmatprep.subr.mxu0 0.0
    %197 = vmatpush1.msra.mxu0 0.0
    %198 = vmatprep.subr.mxu0 0.0
    %199 = vmatpush1.msra.mxu0 0.0
    %200 = vmatprep.subr.mxu0 0.0
    %201 = vmatpush1.msra.mxu0 0.0
    %202 = vmatprep.subr.mxu0 0.0
    %203 = vmatpush1.msra.mxu0 0.0
    %204 = vmatprep.subr.mxu0 0.0
    %205 = vmatpush1.msra.mxu0 0.0
    %206 = vmatprep.subr.mxu0 0.0
    %207 = vmatpush1.msra.mxu0 0.0
    %208 = vmatprep.mubr.f32.mxu0 0.0
    %209 = vmatmul.mubr.f32.gmra.mrb[0].mxu0 %v142
    %v210 = vpop.f32.mrb[0].mxu0
    %v211 = vadd.f32 0.0, %v210
    %v212 = vpop.f32.mrb[0].mxu0
    %213 = vdwg.mxu0
    %v214 = vsel %vm140, %v211, 0.0
    %v215 = vrot.slane %v214, 4
    %v216 = vadd.f32 %v214, %v215
    %v217 = vrot.slane %v216, 2
    %v218 = vadd.f32 %v216, %v217
    %v219 = vrot.slane %v218, 1
    %v220 = vadd.f32 %v218, %v219
    %v221 = vrcp.pop 8.0
    %v222 = vmul.f32 %v220, %v221
    %v223 = vsub.f32 %v211, %v222
    %v224 = vmul.f32 %v223, %v223
    %v225 = vsel %vm140, %v224, 0.0
    %v226 = vrot.slane %v225, 4
    %v227 = vadd.f32 %v225, %v226
    %v228 = vrot.slane %v227, 2
    %v229 = vadd.f32 %v227, %v228
    %v230 = vrot.slane %v229, 1
    %v231 = vadd.f32 %v229, %v230
    %v232 = vmul.f32 %v231, %v221
    %v233 = vld [vmem:[%s4] sm:$0x1]
    %v234 = vadd.f32 %v232, 1e-05
    %v235 = vrsqrt.pop %v234
    %v236 = vmul.f32 %v233, %v235
    %v237 = vld [vmem:[%s4 + $0x4] sm:$0x1]
    %v238 = vmul.f32 %v222, %v236
    %v239 = vsub.f32 %v237, %v238
    %v240 = vlaneseq
    %v241 = vshrl.u32 %v240, 7
    %v242 = vsub.s32 0, %v241
    %v243 = vrot.slane %v236, %v242
    %v244 = vmul.f32 %v211, %v243
    %v245 = vlaneseq
    %v246 = vshrl.u32 %v245, 7
    %v247 = vsub.s32 0, %v246
    %v248 = vrot.slane %v239, %v247
    %v249 = vadd.f32 %v244, %v248
    %v250 = vmax.f32 %v249, 0.0
    %s251 = scalar_lea.vmem [#allocation2], 64
    %v252 = vld [vmem:[%s251] sm:$0xff]
    %v253 = vld [vmem:[%s251 + $0x8] sm:$0xff]
    %v254 = vld [vmem:[%s251 + $0x10] sm:$0xff]
    %v255 = vld [vmem:[%s251 + $0x18] sm:$0xff]
    %v256 = vld [vmem:[%s251 + $0x20] sm:$0xff]
    %v257 = vld [vmem:[%s251 + $0x28] sm:$0xff]
    %v258 = vld [vmem:[%s251 + $0x30] sm:$0xff]
    %v259 = vld [vmem:[%s251 + $0x38] sm:$0xff]
    %v261 = vsel %vm140, %v250, 0
    %263 = vmatprep.subr.mxu0 0.0
    %264 = vmatpush1.msra.mxu0 %v252
    %265 = vmatprep.subr.mxu0 0.0
    %266 = vmatpush1.msra.mxu0 %v253
    %267 = vmatprep.subr.mxu0 0.0
    %268 = vmatpush1.msra.mxu0 %v254
    %269 = vmatprep.subr.mxu0 0.0
    %270 = vmatpush1.msra.mxu0 %v255
    %271 = vmatprep.subr.mxu0 0.0
    %272 = vmatpush1.msra.mxu0 %v256
    %273 = vmatprep.subr.mxu0 0.0
    %274 = vmatpush1.msra.mxu0 %v257
    %275 = vmatprep.subr.mxu0 0.0
    %276 = vmatpush1.msra.mxu0 %v258
    %277 = vmatprep.subr.mxu0 0.0
    %278 = vmatpush1.msra.mxu0 %v259
    %279 = vmatprep.subr.mxu0 0.0
    %280 = vmatpush1.msra.mxu0 0.0
    %281 = vmatprep.subr.mxu0 0.0
    %282 = vmatpush1.msra.mxu0 0.0
    %283 = vmatprep.subr.mxu0 0.0
    %284 = vmatpush1.msra.mxu0 0.0
    %285 = vmatprep.subr.mxu0 0.0
    %286 = vmatpush1.msra.mxu0 0.0
    %287 = vmatprep.subr.mxu0 0.0
    %288 = vmatpush1.msra.mxu0 0.0
    %289 = vmatprep.subr.mxu0 0.0
    %290 = vmatpush1.msra.mxu0 0.0
    %291 = vmatprep.subr.mxu0 0.0
    %292 = vmatpush1.msra.mxu0 0.0
    %293 = vmatprep.subr.mxu0 0.0
    %294 = vmatpush1.msra.mxu0 0.0
    %295 = vmatprep.subr.mxu0 0.0
    %296 = vmatpush1.msra.mxu0 0.0
    %297 = vmatprep.subr.mxu0 0.0
    %298 = vmatpush1.msra.mxu0 0.0
    %299 = vmatprep.subr.mxu0 0.0
    %300 = vmatpush1.msra.mxu0 0.0
    %301 = vmatprep.subr.mxu0 0.0
    %302 = vmatpush1.msra.mxu0 0.0
    %303 = vmatprep.subr.mxu0 0.0
    %304 = vmatpush1.msra.mxu0 0.0
    %305 = vmatprep.subr.mxu0 0.0
    %306 = vmatpush1.msra.mxu0 0.0
    %307 = vmatprep.subr.mxu0 0.0
    %308 = vmatpush1.msra.mxu0 0.0
    %309 = vmatprep.subr.mxu0 0.0
    %310 = vmatpush1.msra.mxu0 0.0
    %311 = vmatprep.subr.mxu0 0.0
    %312 = vmatpush1.msra.mxu0 0.0
    %313 = vmatprep.subr.mxu0 0.0
    %314 = vmatpush1.msra.mxu0 0.0
    %315 = vmatprep.subr.mxu0 0.0
    %316 = vmatpush1.msra.mxu0 0.0
    %317 = vmatprep.subr.mxu0 0.0
    %318 = vmatpush1.msra.mxu0 0.0
    %319 = vmatprep.subr.mxu0 0.0
    %320 = vmatpush1.msra.mxu0 0.0
    %321 = vmatprep.subr.mxu0 0.0
    %322 = vmatpush1.msra.mxu0 0.0
    %323 = vmatprep.subr.mxu0 0.0
    %324 = vmatpush1.msra.mxu0 0.0
    %325 = vmatprep.subr.mxu0 0.0
    %326 = vmatpush1.msra.mxu0 0.0
    %327 = vmatprep.mubr.f32.mxu0 0.0
    %328 = vmatmul.mubr.f32.gmra.mrb[0].mxu0 %v261
    %v329 = vpop.f32.mrb[0].mxu0
    %v330 = vadd.f32 0.0, %v329
    %v331 = vpop.f32.mrb[0].mxu0
    %332 = vdwg.mxu0
    %v333 = vsel %vm140, %v330, 0.0
    %v334 = vrot.slane %v333, 4
    %v335 = vadd.f32 %v333, %v334
    %v336 = vrot.slane %v335, 2
    %v337 = vadd.f32 %v335, %v336
    %v338 = vrot.slane %v337, 1
    %v339 = vadd.f32 %v337, %v338
    %v340 = vmul.f32 %v339, %v221
    %v341 = vsub.f32 %v330, %v340
    %v342 = vmul.f32 %v341, %v341
    %v343 = vsel %vm140, %v342, 0.0
    %v344 = vrot.slane %v343, 4
    %v345 = vadd.f32 %v343, %v344
    %v346 = vrot.slane %v345, 2
    %v347 = vadd.f32 %v345, %v346
    %v348 = vrot.slane %v347, 1
    %v349 = vadd.f32 %v347, %v348
    %v350 = vmul.f32 %v349, %v221
    %v351 = vld [vmem:[%s4 + $0x1] sm:$0x1]
    %v352 = vadd.f32 %v350, 1e-05
    %v353 = vrsqrt.pop %v352
    %v354 = vmul.f32 %v351, %v353
    %v355 = vld [vmem:[%s4 + $0x5] sm:$0x1]
    %v356 = vmul.f32 %v340, %v354
    %v357 = vsub.f32 %v355, %v356
    %v358 = vlaneseq
    %v359 = vshrl.u32 %v358, 7
    %v360 = vsub.s32 0, %v359
    %v361 = vrot.slane %v354, %v360
    %v362 = vmul.f32 %v330, %v361
    %v363 = vlaneseq
    %v364 = vshrl.u32 %v363, 7
    %v365 = vsub.s32 0, %v364
    %v366 = vrot.slane %v357, %v365
    %v367 = vadd.f32 %v362, %v366
    %v368 = vmax.f32 %v367, 0.0
    %v369 = vadd.f32 %v368, %v129
    %s370 = scalar_lea.vmem [#allocation2], 128
    %v371 = vld [vmem:[%s370] sm:$0xff]
    %v372 = vld [vmem:[%s370 + $0x8] sm:$0xff]
    %v373 = vld [vmem:[%s370 + $0x10] sm:$0xff]
    %v374 = vld [vmem:[%s370 + $0x18] sm:$0xff]
    %v375 = vld [vmem:[%s370 + $0x20] sm:$0xff]
    %v376 = vld [vmem:[%s370 + $0x28] sm:$0xff]
    %v377 = vld [vmem:[%s370 + $0x30] sm:$0xff]
    %v378 = vld [vmem:[%s370 + $0x38] sm:$0xff]
    %v380 = vsel %vm140, %v369, 0
    %382 = vmatprep.subr.mxu0 0.0
    %383 = vmatpush1.msra.mxu0 %v371
    %384 = vmatprep.subr.mxu0 0.0
    %385 = vmatpush1.msra.mxu0 %v372
    %386 = vmatprep.subr.mxu0 0.0
    %387 = vmatpush1.msra.mxu0 %v373
    %388 = vmatprep.subr.mxu0 0.0
    %389 = vmatpush1.msra.mxu0 %v374
    %390 = vmatprep.subr.mxu0 0.0
    %391 = vmatpush1.msra.mxu0 %v375
    %392 = vmatprep.subr.mxu0 0.0
    %393 = vmatpush1.msra.mxu0 %v376
    %394 = vmatprep.subr.mxu0 0.0
    %395 = vmatpush1.msra.mxu0 %v377
    %396 = vmatprep.subr.mxu0 0.0
    %397 = vmatpush1.msra.mxu0 %v378
    %398 = vmatprep.subr.mxu0 0.0
    %399 = vmatpush1.msra.mxu0 0.0
    %400 = vmatprep.subr.mxu0 0.0
    %401 = vmatpush1.msra.mxu0 0.0
    %402 = vmatprep.subr.mxu0 0.0
    %403 = vmatpush1.msra.mxu0 0.0
    %404 = vmatprep.subr.mxu0 0.0
    %405 = vmatpush1.msra.mxu0 0.0
    %406 = vmatprep.subr.mxu0 0.0
    %407 = vmatpush1.msra.mxu0 0.0
    %408 = vmatprep.subr.mxu0 0.0
    %409 = vmatpush1.msra.mxu0 0.0
    %410 = vmatprep.subr.mxu0 0.0
    %411 = vmatpush1.msra.mxu0 0.0
    %412 = vmatprep.subr.mxu0 0.0
    %413 = vmatpush1.msra.mxu0 0.0
    %414 = vmatprep.subr.mxu0 0.0
    %415 = vmatpush1.msra.mxu0 0.0
    %416 = vmatprep.subr.mxu0 0.0
    %417 = vmatpush1.msra.mxu0 0.0
    %418 = vmatprep.subr.mxu0 0.0
    %419 = vmatpush1.msra.mxu0 0.0
    %420 = vmatprep.subr.mxu0 0.0
    %421 = vmatpush1.msra.mxu0 0.0
    %422 = vmatprep.subr.mxu0 0.0
    %423 = vmatpush1.msra.mxu0 0.0
    %424 = vmatprep.subr.mxu0 0.0
    %425 = vmatpush1.msra.mxu0 0.0
    %426 = vmatprep.subr.mxu0 0.0
    %427 = vmatpush1.msra.mxu0 0.0
    %428 = vmatprep.subr.mxu0 0.0
    %429 = vmatpush1.msra.mxu0 0.0
    %430 = vmatprep.subr.mxu0 0.0
    %431 = vmatpush1.msra.mxu0 0.0
    %432 = vmatprep.subr.mxu0 0.0
    %433 = vmatpush1.msra.mxu0 0.0
    %434 = vmatprep.subr.mxu0 0.0
    %435 = vmatpush1.msra.mxu0 0.0
    %436 = vmatprep.subr.mxu0 0.0
    %437 = vmatpush1.msra.mxu0 0.0
    %438 = vmatprep.subr.mxu0 0.0
    %439 = vmatpush1.msra.mxu0 0.0
    %440 = vmatprep.subr.mxu0 0.0
    %441 = vmatpush1.msra.mxu0 0.0
    %442 = vmatprep.subr.mxu0 0.0
    %443 = vmatpush1.msra.mxu0 0.0
    %444 = vmatprep.subr.mxu0 0.0
    %445 = vmatpush1.msra.mxu0 0.0
    %446 = vmatprep.mubr.f32.mxu0 0.0
    %447 = vmatmul.mubr.f32.gmra.mrb[0].mxu0 %v380
    %v448 = vpop.f32.mrb[0].mxu0
    %v449 = vadd.f32 0.0, %v448
    %v450 = vpop.f32.mrb[0].mxu0
    %451 = vdwg.mxu0
    %v452 = vsel %vm140, %v449, 0.0
    %v453 = vrot.slane %v452, 4
    %v454 = vadd.f32 %v452, %v453
    %v455 = vrot.slane %v454, 2
    %v456 = vadd.f32 %v454, %v455
    %v457 = vrot.slane %v456, 1
    %v458 = vadd.f32 %v456, %v457
    %v459 = vmul.f32 %v458, %v221
    %v460 = vsub.f32 %v449, %v459
    %v461 = vmul.f32 %v460, %v460
    %v462 = vsel %vm140, %v461, 0.0
    %v463 = vrot.slane %v462, 4
    %v464 = vadd.f32 %v462, %v463
    %v465 = vrot.slane %v464, 2
    %v466 = vadd.f32 %v464, %v465
    %v467 = vrot.slane %v466, 1
    %v468 = vadd.f32 %v466, %v467
    %v469 = vmul.f32 %v468, %v221
    %v470 = vld [vmem:[%s4 + $0x2] sm:$0x1]
    %v471 = vadd.f32 %v469, 1e-05
    %v472 = vrsqrt.pop %v471
    %v473 = vmul.f32 %v470, %v472
    %v474 = vld [vmem:[%s4 + $0x6] sm:$0x1]
    %v475 = vmul.f32 %v459, %v473
    %v476 = vsub.f32 %v474, %v475
    %v477 = vlaneseq
    %v478 = vshrl.u32 %v477, 7
    %v479 = vsub.s32 0, %v478
    %v480 = vrot.slane %v473, %v479
    %v481 = vmul.f32 %v449, %v480
    %v482 = vlaneseq
    %v483 = vshrl.u32 %v482, 7
    %v484 = vsub.s32 0, %v483
    %v485 = vrot.slane %v476, %v484
    %v486 = vadd.f32 %v481, %v485
    %v487 = vmax.f32 %v486, 0.0
    %s488 = scalar_lea.vmem [#allocation2], 192
    %v489 = vld [vmem:[%s488] sm:$0xff]
    %v490 = vld [vmem:[%s488 + $0x8] sm:$0xff]
    %v491 = vld [vmem:[%s488 + $0x10] sm:$0xff]
    %v492 = vld [vmem:[%s488 + $0x18] sm:$0xff]
    %v493 = vld [vmem:[%s488 + $0x20] sm:$0xff]
    %v494 = vld [vmem:[%s488 + $0x28] sm:$0xff]
    %v495 = vld [vmem:[%s488 + $0x30] sm:$0xff]
    %v496 = vld [vmem:[%s488 + $0x38] sm:$0xff]
    %v498 = vsel %vm140, %v487, 0
    %500 = vmatprep.subr.mxu0 0.0
    %501 = vmatpush1.msra.mxu0 %v489
    %502 = vmatprep.subr.mxu0 0.0
    %503 = vmatpush1.msra.mxu0 %v490
    %504 = vmatprep.subr.mxu0 0.0
    %505 = vmatpush1.msra.mxu0 %v491
    %506 = vmatprep.subr.mxu0 0.0
    %507 = vmatpush1.msra.mxu0 %v492
    %508 = vmatprep.subr.mxu0 0.0
    %509 = vmatpush1.msra.mxu0 %v493
    %510 = vmatprep.subr.mxu0 0.0
    %511 = vmatpush1.msra.mxu0 %v494
    %512 = vmatprep.subr.mxu0 0.0
    %513 = vmatpush1.msra.mxu0 %v495
    %514 = vmatprep.subr.mxu0 0.0
    %515 = vmatpush1.msra.mxu0 %v496
    %516 = vmatprep.subr.mxu0 0.0
    %517 = vmatpush1.msra.mxu0 0.0
    %518 = vmatprep.subr.mxu0 0.0
    %519 = vmatpush1.msra.mxu0 0.0
    %520 = vmatprep.subr.mxu0 0.0
    %521 = vmatpush1.msra.mxu0 0.0
    %522 = vmatprep.subr.mxu0 0.0
    %523 = vmatpush1.msra.mxu0 0.0
    %524 = vmatprep.subr.mxu0 0.0
    %525 = vmatpush1.msra.mxu0 0.0
    %526 = vmatprep.subr.mxu0 0.0
    %527 = vmatpush1.msra.mxu0 0.0
    %528 = vmatprep.subr.mxu0 0.0
    %529 = vmatpush1.msra.mxu0 0.0
    %530 = vmatprep.subr.mxu0 0.0
    %531 = vmatpush1.msra.mxu0 0.0
    %532 = vmatprep.subr.mxu0 0.0
    %533 = vmatpush1.msra.mxu0 0.0
    %534 = vmatprep.subr.mxu0 0.0
    %535 = vmatpush1.msra.mxu0 0.0
    %536 = vmatprep.subr.mxu0 0.0
    %537 = vmatpush1.msra.mxu0 0.0
    %538 = vmatprep.subr.mxu0 0.0
    %539 = vmatpush1.msra.mxu0 0.0
    %540 = vmatprep.subr.mxu0 0.0
    %541 = vmatpush1.msra.mxu0 0.0
    %542 = vmatprep.subr.mxu0 0.0
    %543 = vmatpush1.msra.mxu0 0.0
    %544 = vmatprep.subr.mxu0 0.0
    %545 = vmatpush1.msra.mxu0 0.0
    %546 = vmatprep.subr.mxu0 0.0
    %547 = vmatpush1.msra.mxu0 0.0
    %548 = vmatprep.subr.mxu0 0.0
    %549 = vmatpush1.msra.mxu0 0.0
    %550 = vmatprep.subr.mxu0 0.0
    %551 = vmatpush1.msra.mxu0 0.0
    %552 = vmatprep.subr.mxu0 0.0
    %553 = vmatpush1.msra.mxu0 0.0
    %554 = vmatprep.subr.mxu0 0.0
    %555 = vmatpush1.msra.mxu0 0.0
    %556 = vmatprep.subr.mxu0 0.0
    %557 = vmatpush1.msra.mxu0 0.0
    %558 = vmatprep.subr.mxu0 0.0
    %559 = vmatpush1.msra.mxu0 0.0
    %560 = vmatprep.subr.mxu0 0.0
    %561 = vmatpush1.msra.mxu0 0.0
    %562 = vmatprep.subr.mxu0 0.0
    %563 = vmatpush1.msra.mxu0 0.0
    %564 = vmatprep.mubr.f32.mxu0 0.0
    %565 = vmatmul.mubr.f32.gmra.mrb[0].mxu0 %v498
    %v566 = vpop.f32.mrb[0].mxu0
    %v567 = vadd.f32 0.0, %v566
    %v568 = vpop.f32.mrb[0].mxu0
    %569 = vdwg.mxu0
    %v570 = vsel %vm140, %v567, 0.0
    %v571 = vrot.slane %v570, 4
    %v572 = vadd.f32 %v570, %v571
    %v573 = vrot.slane %v572, 2
    %v574 = vadd.f32 %v572, %v573
    %v575 = vrot.slane %v574, 1
    %v576 = vadd.f32 %v574, %v575
    %v577 = vmul.f32 %v576, %v221
    %v578 = vsub.f32 %v567, %v577
    %v579 = vmul.f32 %v578, %v578
    %v580 = vsel %vm140, %v579, 0.0
    %v581 = vrot.slane %v580, 4
    %v582 = vadd.f32 %v580, %v581
    %v583 = vrot.slane %v582, 2
    %v584 = vadd.f32 %v582, %v583
    %v585 = vrot.slane %v584, 1
    %v586 = vadd.f32 %v584, %v585
    %v587 = vmul.f32 %v586, %v221
    %v588 = vld [vmem:[%s4 + $0x3] sm:$0x1]
    %v589 = vadd.f32 %v587, 1e-05
    %v590 = vrsqrt.pop %v589
    %v591 = vmul.f32 %v588, %v590
    %v592 = vld [vmem:[%s4 + $0x7] sm:$0x1]
    %v593 = vmul.f32 %v577, %v591
    %v594 = vsub.f32 %v592, %v593
    %v595 = vlaneseq
    %v596 = vshrl.u32 %v595, 7
    %v597 = vsub.s32 0, %v596
    %v598 = vrot.slane %v591, %v597
    %v599 = vmul.f32 %v567, %v598
    %v600 = vlaneseq
    %v601 = vshrl.u32 %v600, 7
    %v602 = vsub.s32 0, %v601
    %v603 = vrot.slane %v594, %v602
    %v604 = vadd.f32 %v599, %v603
    %v605 = vmax.f32 %v604, 0.0
    %v606 = vadd.f32 %v605, %v369
    %v607 = vld [vmem:[%s5] sm:$0xff]
    %v608 = vld [vmem:[%s5 + $0x8] sm:$0xff]
    %v609 = vld [vmem:[%s5 + $0x10] sm:$0xff]
    %v610 = vld [vmem:[%s5 + $0x18] sm:$0xff]
    %v611 = vld [vmem:[%s5 + $0x20] sm:$0xff]
    %v612 = vld [vmem:[%s5 + $0x28] sm:$0xff]
    %v613 = vld [vmem:[%s5 + $0x30] sm:$0xff]
    %v614 = vld [vmem:[%s5 + $0x38] sm:$0xff]
    %v615 = vld [vmem:[%s6] sm:$0x1]
    %v617 = vlaneseq
    %v618 = vshrl.u32 %v617, 7
    %v619 = vsub.s32 0, %v618
    %v620 = vrot.slane %v615, %v619
    %v623 = vsel %vm140, %v606, 0
    %625 = vmatprep.subr.mxu0 0.0
    %626 = vmatpush1.msra.mxu0 %v607
    %627 = vmatprep.subr.mxu0 0.0
    %628 = vmatpush1.msra.mxu0 %v608
    %629 = vmatprep.subr.mxu0 0.0
    %630 = vmatpush1.msra.mxu0 %v609
    %631 = vmatprep.subr.mxu0 0.0
    %632 = vmatpush1.msra.mxu0 %v610
    %633 = vmatprep.subr.mxu0 0.0
    %634 = vmatpush1.msra.mxu0 %v611
    %635 = vmatprep.subr.mxu0 0.0
    %636 = vmatpush1.msra.mxu0 %v612
    %637 = vmatprep.subr.mxu0 0.0
    %638 = vmatpush1.msra.mxu0 %v613
    %639 = vmatprep.subr.mxu0 0.0
    %640 = vmatpush1.msra.mxu0 %v614
    %641 = vmatprep.subr.mxu0 0.0
    %642 = vmatpush1.msra.mxu0 0.0
    %643 = vmatprep.subr.mxu0 0.0
    %644 = vmatpush1.msra.mxu0 0.0
    %645 = vmatprep.subr.mxu0 0.0
    %646 = vmatpush1.msra.mxu0 0.0
    %647 = vmatprep.subr.mxu0 0.0
    %648 = vmatpush1.msra.mxu0 0.0
    %649 = vmatprep.subr.mxu0 0.0
    %650 = vmatpush1.msra.mxu0 0.0
    %651 = vmatprep.subr.mxu0 0.0
    %652 = vmatpush1.msra.mxu0 0.0
    %653 = vmatprep.subr.mxu0 0.0
    %654 = vmatpush1.msra.mxu0 0.0
    %655 = vmatprep.subr.mxu0 0.0
    %656 = vmatpush1.msra.mxu0 0.0
    %657 = vmatprep.subr.mxu0 0.0
    %658 = vmatpush1.msra.mxu0 0.0
    %659 = vmatprep.subr.mxu0 0.0
    %660 = vmatpush1.msra.mxu0 0.0
    %661 = vmatprep.subr.mxu0 0.0
    %662 = vmatpush1.msra.mxu0 0.0
    %663 = vmatprep.subr.mxu0 0.0
    %664 = vmatpush1.msra.mxu0 0.0
    %665 = vmatprep.subr.mxu0 0.0
    %666 = vmatpush1.msra.mxu0 0.0
    %667 = vmatprep.subr.mxu0 0.0
    %668 = vmatpush1.msra.mxu0 0.0
    %669 = vmatprep.subr.mxu0 0.0
    %670 = vmatpush1.msra.mxu0 0.0
    %671 = vmatprep.subr.mxu0 0.0
    %672 = vmatpush1.msra.mxu0 0.0
    %673 = vmatprep.subr.mxu0 0.0
    %674 = vmatpush1.msra.mxu0 0.0
    %675 = vmatprep.subr.mxu0 0.0
    %676 = vmatpush1.msra.mxu0 0.0
    %677 = vmatprep.subr.mxu0 0.0
    %678 = vmatpush1.msra.mxu0 0.0
    %679 = vmatprep.subr.mxu0 0.0
    %680 = vmatpush1.msra.mxu0 0.0
    %681 = vmatprep.subr.mxu0 0.0
    %682 = vmatpush1.msra.mxu0 0.0
    %683 = vmatprep.subr.mxu0 0.0
    %684 = vmatpush1.msra.mxu0 0.0
    %685 = vmatprep.subr.mxu0 0.0
    %686 = vmatpush1.msra.mxu0 0.0
    %687 = vmatprep.subr.mxu0 0.0
    %688 = vmatpush1.msra.mxu0 0.0
    %689 = vmatprep.mubr.f32.mxu0 0.0
    %690 = vmatmul.mubr.f32.gmra.mrb[0].mxu0 %v623
    %v691 = vpop.f32.mrb[0].mxu0
    %v692 = vadd.f32 %v620, %v691
    %v693 = vpop.f32.mrb[0].mxu0
    %694 = vdwg.mxu0
    %v695 = vld [vmem:[%s7] sm:$0xff]
    %v696 = vld [vmem:[%s7 + $0x8] sm:$0xff]
    %v697 = vld [vmem:[%s7 + $0x10] sm:$0xff]
    %v698 = vld [vmem:[%s7 + $0x18] sm:$0xff]
    %v699 = vld [vmem:[%s8] sm:$0x1]
    %v701 = vlaneseq
    %v702 = vshrl.u32 %v701, 7
    %v703 = vsub.s32 0, %v702
    %v704 = vrot.slane %v699, %v703
    %v707 = vsel %vm58, %v692, 0
    %709 = vmatprep.subr.mxu0 0.0
    %710 = vmatpush1.msra.mxu0 %v695
    %711 = vmatprep.subr.mxu0 0.0
    %712 = vmatpush1.msra.mxu0 %v696
    %713 = vmatprep.subr.mxu0 0.0
    %714 = vmatpush1.msra.mxu0 %v697
    %715 = vmatprep.subr.mxu0 0.0
    %716 = vmatpush1.msra.mxu0 %v698
    %717 = vmatprep.subr.mxu0 0.0
    %718 = vmatpush1.msra.mxu0 0.0
    %719 = vmatprep.subr.mxu0 0.0
    %720 = vmatpush1.msra.mxu0 0.0
    %721 = vmatprep.subr.mxu0 0.0
    %722 = vmatpush1.msra.mxu0 0.0
    %723 = vmatprep.subr.mxu0 0.0
    %724 = vmatpush1.msra.mxu0 0.0
    %725 = vmatprep.subr.mxu0 0.0
    %726 = vmatpush1.msra.mxu0 0.0
    %727 = vmatprep.subr.mxu0 0.0
    %728 = vmatpush1.msra.mxu0 0.0
    %729 = vmatprep.subr.mxu0 0.0
    %730 = vmatpush1.msra.mxu0 0.0
    %731 = vmatprep.subr.mxu0 0.0
    %732 = vmatpush1.msra.mxu0 0.0
    %733 = vmatprep.subr.mxu0 0.0
    %734 = vmatpush1.msra.mxu0 0.0
    %735 = vmatprep.subr.mxu0 0.0
    %736 = vmatpush1.msra.mxu0 0.0
    %737 = vmatprep.subr.mxu0 0.0
    %738 = vmatpush1.msra.mxu0 0.0
    %739 = vmatprep.subr.mxu0 0.0
    %740 = vmatpush1.msra.mxu0 0.0
    %741 = vmatprep.subr.mxu0 0.0
    %742 = vmatpush1.msra.mxu0 0.0
    %743 = vmatprep.subr.mxu0 0.0
    %744 = vmatpush1.msra.mxu0 0.0
    %745 = vmatprep.subr.mxu0 0.0
    %746 = vmatpush1.msra.mxu0 0.0
    %747 = vmatprep.subr.mxu0 0.0
    %748 = vmatpush1.msra.mxu0 0.0
    %749 = vmatprep.subr.mxu0 0.0
    %750 = vmatpush1.msra.mxu0 0.0
    %751 = vmatprep.subr.mxu0 0.0
    %752 = vmatpush1.msra.mxu0 0.0
    %753 = vmatprep.subr.mxu0 0.0
    %754 = vmatpush1.msra.mxu0 0.0
    %755 = vmatprep.subr.mxu0 0.0
    %756 = vmatpush1.msra.mxu0 0.0
    %757 = vmatprep.subr.mxu0 0.0
    %758 = vmatpush1.msra.mxu0 0.0
    %759 = vmatprep.subr.mxu0 0.0
    %760 = vmatpush1.msra.mxu0 0.0
    %761 = vmatprep.subr.mxu0 0.0
    %762 = vmatpush1.msra.mxu0 0.0
    %763 = vmatprep.subr.mxu0 0.0
    %764 = vmatpush1.msra.mxu0 0.0
    %765 = vmatprep.subr.mxu0 0.0
    %766 = vmatpush1.msra.mxu0 0.0
    %767 = vmatprep.subr.mxu0 0.0
    %768 = vmatpush1.msra.mxu0 0.0
    %769 = vmatprep.subr.mxu0 0.0
    %770 = vmatpush1.msra.mxu0 0.0
    %771 = vmatprep.subr.mxu0 0.0
    %772 = vmatpush1.msra.mxu0 0.0
    %773 = vmatprep.mubr.f32.mxu0 0.0
    %774 = vmatmul.mubr.f32.gmra.mrb[0].mxu0 %v707
    %v775 = vpop.f32.mrb[0].mxu0
    %v776 = vadd.f32 %v704, %v775
    %v777 = vpop.f32.mrb[0].mxu0
    %778 = vdwg.mxu0
    %779 = vrot.lane.b32.xlu0 %v692, 64
    %v780 = vpop.permute.xlu0 %779
    %783 = vrot.lane.b32.xlu0 %v776, 96
    %v784 = vpop.permute.xlu0 %783
    %v786 = vsel %vm140, %v606, %v780
    %vm787 = vcmask 785408
    %v788 = vsel %vm787, %v786, %v784
    %789 = vst [vmem:[%s9] sm:$0xff] %v788
    // Predicated region
    $region42: #{forward.1} parent=1 // pred_check
      _
    $region43: #{forward.1} parent=1 // pred_check_branch
      %791 = sbr.rel (0) target = $region45
    $region44: #{forward.1} parent=1 // pred_region
      _
    $region45: #{forward.1} parent=1 // pred_fallthru
      _
    // Predicated region
    $region46: #{forward.1} parent=1 // pred_check
      _
    $region47: #{forward.1} parent=1 // pred_check_branch
      %793 = sbr.rel (0) target = $region49
    $region48: #{forward.1} parent=1 // pred_region
      _
    $region49: #{forward.1} parent=1 // pred_fallthru
      _
    %794 = vsyncpa [#allocation3], 1

</llo_original>
